<compile_context>
chip_gen: v6e
topology: v6e:2x2x1
jax: 0.10.0
libtpu: 0.0.40
codegen_flags: <defaults>
</compile_context>

<pallas_src>
import functools

import jax
import jax.numpy as jnp
from jax.experimental import pallas as pl
from jax.experimental.pallas import tpu as pltpu


# ---------------------------------------------------------------------------
# Fused single-pass kernel: pool + SE MLP + sigmoid + 1x1 conv, both branches
# ---------------------------------------------------------------------------
def _anc_fused_kernel(x1_ref, x2_ref, w1t_ref, b1_ref, w2_ref, b2_ref,
                      wct_ref, bc_ref, o_ref, *, inv_hw, Co):
    """Grid = (B,).  x*_ref: (1, C, HW);  o_ref: (1, 2*Co, HW).
    Weights: w1t (C,Cr), b1 (1,Cr), w2 (C,Cr), b2 (C,1), wct (C,Co), bc (Co,1)."""
    w1t = w1t_ref[...]
    b1 = b1_ref[...]
    w2 = w2_ref[...]
    b2 = b2_ref[...]
    wct = wct_ref[...]
    bc = bc_ref[...]
    dims = (((0,), (0,)), ((), ()))   # contract dim 0 of both (transposed-LHS matmul)

    def branch(x):
        # squeeze: global average pool (f32 accumulation), channels on sublanes
        pooled = jnp.sum(x.astype(jnp.float32), axis=1, keepdims=True) * inv_hw   # (C, 1)
        # excitation: Linear(C->Cr) + ReLU, Linear(Cr->C) + Sigmoid (tiny)
        z = jnp.maximum(jnp.sum(w1t * pooled, axis=0, keepdims=True) + b1, 0.0)   # (1, Cr)
        s = jax.nn.sigmoid(jnp.sum(w2 * z, axis=1, keepdims=True) + b2)           # (C, 1)
        # fold SE scale into the (tiny) shared conv weight, then one MXU matmul
        w_eff = (wct * s).astype(x.dtype)                                          # (C, Co)
        y = jax.lax.dot_general(w_eff, x, dims,
                                preferred_element_type=jnp.float32)                # (Co, HW)
        return y + bc

    o_ref[0, 0:Co, :] = branch(x1_ref[0]).astype(o_ref.dtype)
    o_ref[0, Co:2 * Co, :] = branch(x2_ref[0]).astype(o_ref.dtype)


# ---------------------------------------------------------------------------
# Fallback pass 1: SE channel scales (VPU-friendly tiled pool + excitation)
# ---------------------------------------------------------------------------
def _se_scale_kernel(x1_ref, x2_ref, w1t_ref, b1_ref, w2_ref, b2_ref,
                     s_ref, acc1, acc2, *, inv_hw):
    """Grid = (B, nT).  x*_ref: (1, C, tHW)  ->  s_ref: (1, 2, C, 1)."""
    t = pl.program_id(1)

    @pl.when(t == 0)
    def _init():
        acc1[...] = jnp.zeros_like(acc1)
        acc2[...] = jnp.zeros_like(acc2)

    def accumulate(acc_ref, x):
        # Keep the per-tile work on the VPU: add the tHW//128 lane-groups into a
        # (C, 128) accumulator; the single cross-lane reduce happens in finalize.
        xf = x.astype(jnp.float32)
        part = xf[:, 0:128]
        for j in range(1, xf.shape[-1] // 128):
            part = part + xf[:, j * 128:(j + 1) * 128]
        acc_ref[...] += part

    accumulate(acc1, x1_ref[0])
    accumulate(acc2, x2_ref[0])

    @pl.when(t == pl.num_programs(1) - 1)
    def _finalize():
        def excite(acc):
            pooled = jnp.sum(acc[...], axis=1, keepdims=True) * inv_hw            # (C, 1)
            z = jnp.sum(w1t_ref[...] * pooled, axis=0, keepdims=True)             # (1, Cr)
            z = jnp.maximum(z + b1_ref[...], 0.0)
            s = jnp.sum(w2_ref[...] * z, axis=1, keepdims=True) + b2_ref[...]     # (C, 1)
            return jax.nn.sigmoid(s)

        s_ref[0, 0] = excite(acc1)
        s_ref[0, 1] = excite(acc2)


# ---------------------------------------------------------------------------
# Fallback pass 2: tiled 1x1 conv, in-kernel SE fold, sliced concatenated stores
# ---------------------------------------------------------------------------
def _anc_conv_kernel(s_ref, x1_ref, x2_ref, wct_ref, bc_ref, o_ref, *, Co):
    """Grid = (B, nT).  s_ref: (1,2,C,1); x*_ref: (1,C,tHW); wct: (C,Co); bc: (Co,1);
    o_ref: (1, 2*Co, tHW)."""
    wct = wct_ref[...]
    bc = bc_ref[...]
    dims = (((0,), (0,)), ((), ()))

    def branch(s, x):
        w_eff = (wct * s).astype(x.dtype)                                          # (C, Co)
        y = jax.lax.dot_general(w_eff, x, dims,
                                preferred_element_type=jnp.float32)                # (Co, tHW)
        return y + bc

    o_ref[0, 0:Co, :] = branch(s_ref[0, 0], x1_ref[0]).astype(o_ref.dtype)
    o_ref[0, Co:2 * Co, :] = branch(s_ref[0, 1], x2_ref[0]).astype(o_ref.dtype)


# ---------------------------------------------------------------------------
# Generation-gated budgets & tile selection
# ---------------------------------------------------------------------------
def _vmem_budgets():
    """(per-step tile budget, vmem_limit_bytes) gated on physical VMEM."""
    cap = 64 << 20
    try:
        cap = int(getattr(pltpu.get_tpu_info(), "vmem_capacity_bytes", cap))
    except Exception:
        pass
    if cap >= (100 << 20):            # v5e / v6e: 128 MiB physical VMEM
        return 40 << 20, 96 << 20
    return 18 << 20, 40 << 20         # v7x: 64 MiB physical VMEM


def _fused_footprint_bytes(C, Co, HW, in_bytes, out_bytes):
    """Conservative per-grid-step VMEM footprint of the fused kernel."""
    db_in = 2 * (2 * C * HW * in_bytes)          # x1 + x2, double-buffered
    db_out = 2 * (2 * Co * HW * out_bytes)       # output, double-buffered
    f32_tmp = 2 * Co * HW * 4 + 2 * C * HW * 4   # f32 matmul results + widening temps
    return db_in + db_out + f32_tmp + (1 << 20)


def _pick_hw_tile(HWp, C, Co, in_bytes, out_bytes, budget_bytes):
    """Largest multiple of 128 dividing HWp whose conv-pass per-step footprint fits."""
    per_col = 4 * C * in_bytes + 4 * Co * out_bytes + 2 * Co * 4
    cap = max(128, (budget_bytes // per_col) // 128 * 128)
    cap = min(cap, 8192)              # bounds pass-1 trace-time unroll; still lane-dense
    t = min(cap, HWp) // 128 * 128
    while t > 128 and HWp % t != 0:
        t -= 128
    return max(t, 128)


# ---------------------------------------------------------------------------
# Wrapper
# ---------------------------------------------------------------------------
def anc_block(x1, x2, params, *, hw_tile=None, force_two_pass=False):
    """ANCBlock forward.  x1, x2: NCHW (f32 or bf16).  Output: NCHW, 2*(C//2) channels,
    same dtype as the inputs (bf16 I/O halves HBM traffic on this mem-bound op)."""
    B, C, H, W = x1.shape
    assert x2.shape == x1.shape and x2.dtype == x1.dtype
    w1t, b1r, w2, b2c, wct, bcc = params
    Cr = w1t.shape[1]
    Co = wct.shape[1]
    HW = H * W
    out_dtype = x1.dtype
    in_bytes = jnp.dtype(x1.dtype).itemsize
    out_bytes = jnp.dtype(out_dtype).itemsize
    inv_hw = 1.0 / HW

    tile_budget, vmem_limit = _vmem_budgets()

    # free reshapes (contiguous last dims), no transposes
    x1f = x1.reshape(B, C, HW)
    x2f = x2.reshape(B, C, HW)

    use_fused = ((not force_two_pass) and (hw_tile is None)
                 and _fused_footprint_bytes(C, Co, HW, in_bytes, out_bytes) <= tile_budget)

    if use_fused:
        out_flat = pl.pallas_call(
            functools.partial(_anc_fused_kernel, inv_hw=inv_hw, Co=Co),
            out_shape=jax.ShapeDtypeStruct((B, 2 * Co, HW), out_dtype),
            grid_spec=pltpu.PrefetchScalarGridSpec(
                num_scalar_prefetch=0,
                grid=(B,),
                in_specs=[
                    pl.BlockSpec((1, C, HW), lambda b: (b, 0, 0)),
                    pl.BlockSpec((1, C, HW), lambda b: (b, 0, 0)),
                    pl.BlockSpec((C, Cr), lambda b: (0, 0)),
                    pl.BlockSpec((1, Cr), lambda b: (0, 0)),
                    pl.BlockSpec((C, Cr), lambda b: (0, 0)),
                    pl.BlockSpec((C, 1), lambda b: (0, 0)),
                    pl.BlockSpec((C, Co), lambda b: (0, 0)),
                    pl.BlockSpec((Co, 1), lambda b: (0, 0)),
                ],
                out_specs=pl.BlockSpec((1, 2 * Co, HW), lambda b: (b, 0, 0)),
            ),
            compiler_params=pltpu.CompilerParams(
                dimension_semantics=("parallel",),
                vmem_limit_bytes=vmem_limit,
            ),
        )(x1f, x2f, w1t, b1r, w2, b2c, wct, bcc)
        return out_flat.reshape(B, 2 * Co, H, W)

    # ---- fallback (image does not fit VMEM): two HW-tiled passes ----
    # Pad HW to a multiple of 128 (zero tail: does not change pooled sums; padded
    # output columns are dropped below) instead of falling back to a full-extent block.
    HWp = ((HW + 127) // 128) * 128
    if HWp != HW:
        pad = ((0, 0), (0, 0), (0, HWp - HW))
        x1f = jnp.pad(x1f, pad)
        x2f = jnp.pad(x2f, pad)

    tHW = hw_tile if hw_tile is not None else _pick_hw_tile(HWp, C, Co, in_bytes,
                                                            out_bytes, tile_budget)
    assert HWp % tHW == 0 and tHW % 128 == 0, (HWp, tHW)
    nT = HWp // tHW

    # pass 1: SE scales for both inputs -> (B, 2, C, 1)
    s_all = pl.pallas_call(
        functools.partial(_se_scale_kernel, inv_hw=inv_hw),
        out_shape=jax.ShapeDtypeStruct((B, 2, C, 1), jnp.float32),
        grid_spec=pltpu.PrefetchScalarGridSpec(
            num_scalar_prefetch=0,
            grid=(B, nT),
            in_specs=[
                pl.BlockSpec((1, C, tHW), lambda b, t: (b, 0, t)),
                pl.BlockSpec((1, C, tHW), lambda b, t: (b, 0, t)),
                pl.BlockSpec((C, Cr), lambda b, t: (0, 0)),
                pl.BlockSpec((1, Cr), lambda b, t: (0, 0)),
                pl.BlockSpec((C, Cr), lambda b, t: (0, 0)),
                pl.BlockSpec((C, 1), lambda b, t: (0, 0)),
            ],
            out_specs=pl.BlockSpec((1, 2, C, 1), lambda b, t: (b, 0, 0, 0)),
            scratch_shapes=[pltpu.VMEM((C, 128), jnp.float32),
                            pltpu.VMEM((C, 128), jnp.float32)],
        ),
        compiler_params=pltpu.CompilerParams(
            dimension_semantics=("parallel", "arbitrary"),
            vmem_limit_bytes=vmem_limit,
        ),
    )(x1f, x2f, w1t, b1r, w2, b2c)

    # pass 2: HW-tiled conv, both branches fused, in-kernel SE fold, sliced stores
    out_flat = pl.pallas_call(
        functools.partial(_anc_conv_kernel, Co=Co),
        out_shape=jax.ShapeDtypeStruct((B, 2 * Co, HWp), out_dtype),
        grid_spec=pltpu.PrefetchScalarGridSpec(
            num_scalar_prefetch=0,
            grid=(B, nT),
            in_specs=[
                pl.BlockSpec((1, 2, C, 1), lambda b, t: (b, 0, 0, 0)),
                pl.BlockSpec((1, C, tHW), lambda b, t: (b, 0, t)),
                pl.BlockSpec((1, C, tHW), lambda b, t: (b, 0, t)),
                pl.BlockSpec((C, Co), lambda b, t: (0, 0)),
                pl.BlockSpec((Co, 1), lambda b, t: (0, 0)),
            ],
            out_specs=pl.BlockSpec((1, 2 * Co, tHW), lambda b, t: (b, 0, t)),
        ),
        compiler_params=pltpu.CompilerParams(
            dimension_semantics=("parallel", "parallel"),
            vmem_limit_bytes=vmem_limit,
        ),
    )(s_all, x1f, x2f, wct, bcc)

    if HWp != HW:
        out_flat = out_flat[:, :, :HW]
    return out_flat.reshape(B, 2 * Co, H, W)


# ---------------------------------------------------------------------------
# Parameters + pure-JAX reference
# ---------------------------------------------------------------------------
def init_anc_params(key, in_channels, reduction_ratio=16):
    """Deterministic init; shapes mirror the PyTorch module, stored kernel-friendly."""
    C = in_channels
    Cr = max(1, C // reduction_ratio)
    Co = C // 2
    k1, k2, k3, k4, k5, k6 = jax.random.split(key, 6)
    w1 = jax.random.normal(k1, (Cr, C), jnp.float32) * 0.1    # Linear(C -> Cr).weight
    b1 = jax.random.normal(k2, (Cr,), jnp.float32) * 0.01
    w2 = jax.random.normal(k3, (C, Cr), jnp.float32) * 0.1    # Linear(Cr -> C).weight
    b2 = jax.random.normal(k4, (C,), jnp.float32) * 0.01
    wc = jax.random.normal(k5, (Co, C), jnp.float32) * 0.1    # Conv2d(C -> Co, 1).weight
    bc = jax.random.normal(k6, (Co,), jnp.float32) * 0.01
    return (w1.T,            # (C, Cr)
            b1[None, :],     # (1, Cr)
            w2,              # (C, Cr)
            b2[:, None],     # (C, 1)
            wc.T,            # (C, Co)  -- transposed so the in-kernel SE fold is a
            bc[:, None])     # (Co, 1)     lane-broadcast with no relayout


def _reference(x1, x2, params):
    """Pure-JAX reference mirroring the PyTorch forward."""
    w1t, b1r, w2, b2c, wct, bcc = params
    w1 = w1t.T              # (Cr, C)
    b1 = b1r[0]
    b2 = b2c[:, 0]
    wc = wct.T              # (Co, C)
    bc = bcc[:, 0]

    def branch(x):
        pooled = jnp.mean(x, axis=(2, 3))                     # (B, C)
        z = jnp.maximum(pooled @ w1.T + b1, 0.0)              # (B, Cr)
        s = jax.nn.sigmoid(z @ w2.T + b2)                     # (B, C)
        xs = x * s[:, :, None, None]
        return jnp.einsum('oc,bchw->bohw', wc, xs) + bc[None, :, None, None]

    return jnp.concatenate([branch(x1), branch(x2)], axis=1)


if __name__ == "__main__":
    key = jax.random.PRNGKey(0)
    kx1, kx2, kp = jax.random.split(key, 3)

    B, C, H, W = 2, 32, 16, 16   # in_channels must be >= reduction_ratio(=16)
    x1 = jax.random.normal(kx1, (B, C, H, W), jnp.float32)
    x2 = jax.random.normal(kx2, (B, C, H, W), jnp.float32)
    params = init_anc_params(kp, C, reduction_ratio=16)

    ref = jax.block_until_ready(_reference(x1, x2, params))

    # fused single-pass path (whole image fits VMEM)
    out = jax.block_until_ready(anc_block(x1, x2, params))
    assert out.shape == (B, C, H, W), out.shape
    assert jnp.allclose(out, ref, atol=1e-4, rtol=1e-4), float(jnp.max(jnp.abs(out - ref)))

    # forced two-pass tiled path (exercises cross-tile pooled-sum accumulation + fold)
    out_t = jax.block_until_ready(anc_block(x1, x2, params, force_two_pass=True, hw_tile=128))
    assert jnp.allclose(out_t, ref, atol=1e-4, rtol=1e-4), float(jnp.max(jnp.abs(out_t - ref)))

    # bf16 HBM I/O (halves HBM traffic on the mem-bound path); f32 accumulation inside
    out_bf = jax.block_until_ready(
        anc_block(x1.astype(jnp.bfloat16), x2.astype(jnp.bfloat16), params))
    assert out_bf.dtype == jnp.bfloat16
    assert jnp.allclose(out_bf.astype(jnp.float32), ref, atol=1e-1, rtol=1e-1), \
        float(jnp.max(jnp.abs(out_bf.astype(jnp.float32) - ref)))

    print("KERNEL_OK")
</pallas_src>

<mosaic_0001>
module attributes {stable_mosaic.version = 11 : i64} {
  func.func @_anc_fused_kernel(%arg0: i32, %arg1: memref<1x32x256xf32, #tpu.memory_space<vmem>>, %arg2: memref<1x32x256xf32, #tpu.memory_space<vmem>>, %arg3: memref<32x2xf32, #tpu.memory_space<vmem>>, %arg4: memref<1x2xf32, #tpu.memory_space<vmem>>, %arg5: memref<32x2xf32, #tpu.memory_space<vmem>>, %arg6: memref<32x1xf32, #tpu.memory_space<vmem>>, %arg7: memref<32x16xf32, #tpu.memory_space<vmem>>, %arg8: memref<16x1xf32, #tpu.memory_space<vmem>>, %arg9: memref<1x32x256xf32, #tpu.memory_space<vmem>>) attributes {dimension_semantics = [#tpu.dimension_semantics<parallel>], iteration_bounds = array<i64: 2>, scalar_prefetch = 0 : i64, scratch_operands = 0 : i64, tpu.core_type = #tpu.core_type<tc>, window_params = [{transform_indices = @transform_0, window_bounds = array<i64: 1, 32, 256>}, {transform_indices = @transform_1, window_bounds = array<i64: 1, 32, 256>}, {pipeline_mode = #tpu.pipeline_mode<synchronous>, transform_indices = @transform_2, window_bounds = array<i64: 32, 2>}, {pipeline_mode = #tpu.pipeline_mode<synchronous>, transform_indices = @transform_3, window_bounds = array<i64: 1, 2>}, {pipeline_mode = #tpu.pipeline_mode<synchronous>, transform_indices = @transform_4, window_bounds = array<i64: 32, 2>}, {pipeline_mode = #tpu.pipeline_mode<synchronous>, transform_indices = @transform_5, window_bounds = array<i64: 32, 1>}, {pipeline_mode = #tpu.pipeline_mode<synchronous>, transform_indices = @transform_6, window_bounds = array<i64: 32, 16>}, {pipeline_mode = #tpu.pipeline_mode<synchronous>, transform_indices = @transform_7, window_bounds = array<i64: 16, 1>}, {transform_indices = @transform_8, window_bounds = array<i64: 1, 32, 256>}]} {
    %c0 = arith.constant 0 : index
    %c0_0 = arith.constant 0 : index
    %0 = vector.load %arg3[%c0, %c0_0] : memref<32x2xf32, #tpu.memory_space<vmem>>, vector<32x2xf32>
    %c0_1 = arith.constant 0 : index
    %c0_2 = arith.constant 0 : index
    %1 = vector.load %arg4[%c0_1, %c0_2] : memref<1x2xf32, #tpu.memory_space<vmem>>, vector<1x2xf32>
    %c0_3 = arith.constant 0 : index
    %c0_4 = arith.constant 0 : index
    %2 = vector.load %arg5[%c0_3, %c0_4] : memref<32x2xf32, #tpu.memory_space<vmem>>, vector<32x2xf32>
    %c0_5 = arith.constant 0 : index
    %c0_6 = arith.constant 0 : index
    %3 = vector.load %arg6[%c0_5, %c0_6] : memref<32x1xf32, #tpu.memory_space<vmem>>, vector<32x1xf32>
    %c0_7 = arith.constant 0 : index
    %c0_8 = arith.constant 0 : index
    %4 = vector.load %arg7[%c0_7, %c0_8] : memref<32x16xf32, #tpu.memory_space<vmem>>, vector<32x16xf32>
    %c0_9 = arith.constant 0 : index
    %c0_10 = arith.constant 0 : index
    %5 = vector.load %arg8[%c0_9, %c0_10] : memref<16x1xf32, #tpu.memory_space<vmem>>, vector<16x1xf32>
    %c0_11 = arith.constant 0 : index
    %c0_12 = arith.constant 0 : index
    %c0_13 = arith.constant 0 : index
    %6 = vector.load %arg1[%c0_11, %c0_12, %c0_13] : memref<1x32x256xf32, #tpu.memory_space<vmem>>, vector<1x32x256xf32>
    %7 = vector.shape_cast %6 : vector<1x32x256xf32> to vector<32x256xf32>
    %cst = arith.constant dense<0.000000e+00> : vector<32xf32>
    %8 = vector.multi_reduction <add>, %7, %cst [1] : vector<32x256xf32> to vector<32xf32>
    %9 = vector.shape_cast %8 : vector<32xf32> to vector<32x1xf32>
    %cst_14 = arith.constant 3.906250e-03 : f32
    %10 = vector.broadcast %cst_14 : f32 to vector<32x1xf32>
    %11 = arith.mulf %9, %10 : vector<32x1xf32>
    %12 = vector.broadcast %11 : vector<32x1xf32> to vector<32x2xf32>
    %13 = arith.mulf %0, %12 : vector<32x2xf32>
    %cst_15 = arith.constant dense<0.000000e+00> : vector<2xf32>
    %14 = vector.multi_reduction <add>, %13, %cst_15 [0] : vector<32x2xf32> to vector<2xf32>
    %15 = vector.shape_cast %14 : vector<2xf32> to vector<1x2xf32>
    %16 = arith.addf %15, %1 : vector<1x2xf32>
    %cst_16 = arith.constant 0.000000e+00 : f32
    %17 = vector.broadcast %cst_16 : f32 to vector<1x2xf32>
    %18 = arith.maximumf %16, %17 : vector<1x2xf32>
    %19 = vector.broadcast %18 : vector<1x2xf32> to vector<32x2xf32>
    %20 = arith.mulf %2, %19 : vector<32x2xf32>
    %cst_17 = arith.constant dense<0.000000e+00> : vector<32xf32>
    %21 = vector.multi_reduction <add>, %20, %cst_17 [1] : vector<32x2xf32> to vector<32xf32>
    %22 = vector.shape_cast %21 : vector<32xf32> to vector<32x1xf32>
    %23 = arith.addf %22, %3 : vector<32x1xf32>
    %24 = arith.negf %23 : vector<32x1xf32>
    %25 = math.exp %24 : vector<32x1xf32>
    %cst_18 = arith.constant 1.000000e+00 : f32
    %26 = vector.broadcast %cst_18 : f32 to vector<32x1xf32>
    %27 = arith.addf %26, %25 : vector<32x1xf32>
    %28 = arith.divf %26, %27 : vector<32x1xf32>
    %29 = vector.broadcast %28 : vector<32x1xf32> to vector<32x16xf32>
    %30 = arith.mulf %4, %29 : vector<32x16xf32>
    %cst_19 = arith.constant dense<0.000000e+00> : vector<16x256xf32>
    %31 = tpu.matmul %30, %7, %cst_19 {dimension_numbers = #tpu.dot_dimension_numbers<[0], [0], [1], [1], [0, 1, 1, 1], [], []>} : vector<32x16xf32>, vector<32x256xf32>, vector<16x256xf32> -> vector<16x256xf32>
    %32 = vector.broadcast %5 : vector<16x1xf32> to vector<16x256xf32>
    %33 = arith.addf %31, %32 : vector<16x256xf32>
    %c0_20 = arith.constant 0 : index
    %c0_21 = arith.constant 0 : index
    %c0_22 = arith.constant 0 : index
    %34 = vector.load %arg9[%c0_20, %c0_21, %c0_22] : memref<1x32x256xf32, #tpu.memory_space<vmem>>, vector<1x16x256xf32>
    %35 = vector.shape_cast %34 : vector<1x16x256xf32> to vector<16x256xf32>
    %36 = vector.shape_cast %33 : vector<16x256xf32> to vector<1x16x256xf32>
    tpu.vector_store %arg9[%c0_20, %c0_21, %c0_22], %36 {strides = array<i32>} : memref<1x32x256xf32, #tpu.memory_space<vmem>>, vector<1x16x256xf32>,
    %c0_23 = arith.constant 0 : index
    %c0_24 = arith.constant 0 : index
    %c0_25 = arith.constant 0 : index
    %37 = vector.load %arg2[%c0_23, %c0_24, %c0_25] : memref<1x32x256xf32, #tpu.memory_space<vmem>>, vector<1x32x256xf32>
    %38 = vector.shape_cast %37 : vector<1x32x256xf32> to vector<32x256xf32>
    %cst_26 = arith.constant dense<0.000000e+00> : vector<32xf32>
    %39 = vector.multi_reduction <add>, %38, %cst_26 [1] : vector<32x256xf32> to vector<32xf32>
    %40 = vector.shape_cast %39 : vector<32xf32> to vector<32x1xf32>
    %cst_27 = arith.constant 3.906250e-03 : f32
    %41 = vector.broadcast %cst_27 : f32 to vector<32x1xf32>
    %42 = arith.mulf %40, %41 : vector<32x1xf32>
    %43 = vector.broadcast %42 : vector<32x1xf32> to vector<32x2xf32>
    %44 = arith.mulf %0, %43 : vector<32x2xf32>
    %cst_28 = arith.constant dense<0.000000e+00> : vector<2xf32>
    %45 = vector.multi_reduction <add>, %44, %cst_28 [0] : vector<32x2xf32> to vector<2xf32>
    %46 = vector.shape_cast %45 : vector<2xf32> to vector<1x2xf32>
    %47 = arith.addf %46, %1 : vector<1x2xf32>
    %cst_29 = arith.constant 0.000000e+00 : f32
    %48 = vector.broadcast %cst_29 : f32 to vector<1x2xf32>
    %49 = arith.maximumf %47, %48 : vector<1x2xf32>
    %50 = vector.broadcast %49 : vector<1x2xf32> to vector<32x2xf32>
    %51 = arith.mulf %2, %50 : vector<32x2xf32>
    %cst_30 = arith.constant dense<0.000000e+00> : vector<32xf32>
    %52 = vector.multi_reduction <add>, %51, %cst_30 [1] : vector<32x2xf32> to vector<32xf32>
    %53 = vector.shape_cast %52 : vector<32xf32> to vector<32x1xf32>
    %54 = arith.addf %53, %3 : vector<32x1xf32>
    %55 = arith.negf %54 : vector<32x1xf32>
    %56 = math.exp %55 : vector<32x1xf32>
    %cst_31 = arith.constant 1.000000e+00 : f32
    %57 = vector.broadcast %cst_31 : f32 to vector<32x1xf32>
    %58 = arith.addf %57, %56 : vector<32x1xf32>
    %59 = arith.divf %57, %58 : vector<32x1xf32>
    %60 = vector.broadcast %59 : vector<32x1xf32> to vector<32x16xf32>
    %61 = arith.mulf %4, %60 : vector<32x16xf32>
    %cst_32 = arith.constant dense<0.000000e+00> : vector<16x256xf32>
    %62 = tpu.matmul %61, %38, %cst_32 {dimension_numbers = #tpu.dot_dimension_numbers<[0], [0], [1], [1], [0, 1, 1, 1], [], []>} : vector<32x16xf32>, vector<32x256xf32>, vector<16x256xf32> -> vector<16x256xf32>
    %63 = vector.broadcast %5 : vector<16x1xf32> to vector<16x256xf32>
    %64 = arith.addf %62, %63 : vector<16x256xf32>
    %c0_33 = arith.constant 0 : index
    %c16 = arith.constant 16 : index
    %c0_34 = arith.constant 0 : index
    %65 = vector.load %arg9[%c0_33, %c16, %c0_34] : memref<1x32x256xf32, #tpu.memory_space<vmem>>, vector<1x16x256xf32>
    %66 = vector.shape_cast %65 : vector<1x16x256xf32> to vector<16x256xf32>
    %67 = vector.shape_cast %64 : vector<16x256xf32> to vector<1x16x256xf32>
    tpu.vector_store %arg9[%c0_33, %c16, %c0_34], %67 {strides = array<i32>} : memref<1x32x256xf32, #tpu.memory_space<vmem>>, vector<1x16x256xf32>,
    return
  }
  func.func @transform_0(%arg0: i32) -> (i32, i32, i32) {
    %c0_i32 = arith.constant 0 : i32
    %c0_i32_0 = arith.constant 0 : i32
    %c0_i32_1 = arith.constant 0 : i32
    return %arg0, %c0_i32, %c0_i32_0 : i32, i32, i32
  }
  func.func @transform_1(%arg0: i32) -> (i32, i32, i32) {
    %c0_i32 = arith.constant 0 : i32
    %c0_i32_0 = arith.constant 0 : i32
    %c0_i32_1 = arith.constant 0 : i32
    return %arg0, %c0_i32, %c0_i32_0 : i32, i32, i32
  }
  func.func @transform_2(%arg0: i32) -> (i32, i32) {
    %c0_i32 = arith.constant 0 : i32
    %c0_i32_0 = arith.constant 0 : i32
    %c0_i32_1 = arith.constant 0 : i32
    return %c0_i32, %c0_i32_0 : i32, i32
  }
  func.func @transform_3(%arg0: i32) -> (i32, i32) {
    %c0_i32 = arith.constant 0 : i32
    %c0_i32_0 = arith.constant 0 : i32
    %c0_i32_1 = arith.constant 0 : i32
    return %c0_i32, %c0_i32_0 : i32, i32
  }
  func.func @transform_4(%arg0: i32) -> (i32, i32) {
    %c0_i32 = arith.constant 0 : i32
    %c0_i32_0 = arith.constant 0 : i32
    %c0_i32_1 = arith.constant 0 : i32
    return %c0_i32, %c0_i32_0 : i32, i32
  }
  func.func @transform_5(%arg0: i32) -> (i32, i32) {
    %c0_i32 = arith.constant 0 : i32
    %c0_i32_0 = arith.constant 0 : i32
    %c0_i32_1 = arith.constant 0 : i32
    return %c0_i32, %c0_i32_0 : i32, i32
  }
  func.func @transform_6(%arg0: i32) -> (i32, i32) {
    %c0_i32 = arith.constant 0 : i32
    %c0_i32_0 = arith.constant 0 : i32
    %c0_i32_1 = arith.constant 0 : i32
    return %c0_i32, %c0_i32_0 : i32, i32
  }
  func.func @transform_7(%arg0: i32) -> (i32, i32) {
    %c0_i32 = arith.constant 0 : i32
    %c0_i32_0 = arith.constant 0 : i32
    %c0_i32_1 = arith.constant 0 : i32
    return %c0_i32, %c0_i32_0 : i32, i32
  }
  func.func @transform_8(%arg0: i32) -> (i32, i32, i32) {
    %c0_i32 = arith.constant 0 : i32
    %c0_i32_0 = arith.constant 0 : i32
    %c0_i32_1 = arith.constant 0 : i32
    return %arg0, %c0_i32, %c0_i32_0 : i32, i32, i32
  }
}

</mosaic_0001>

<llo_original>
// kernel: tpu_custom_call.1
$region0: #{tpu_custom_call.1}
  #allocation0 [shape = 'u32[]', space=smem, size = 0x4, offset = 0x4, fixed_abs, tag = 'smem constant byte address 0x4 - core index']
  #allocation1 [shape = 'u32[144,128]{1,0:T(1,128)}', space=vmem, size = 0x12000, scoped, tag = 'internal scratch']
  %s0 = inlined_call_operand.vmem [shape: f32[2,32,256], index: 0, kind: input, shape index: {}]
  %s1 = inlined_call_operand.hbm [shape: f32[2,32,256], index: 1, kind: input, shape index: {}]
  %s2 = inlined_call_operand.vmem [shape: f32[32,2], index: 2, kind: input, shape index: {}]
  %s3 = inlined_call_operand.vmem [shape: f32[1,2], index: 3, kind: input, shape index: {}]
  %s4 = inlined_call_operand.vmem [shape: f32[32,2], index: 4, kind: input, shape index: {}]
  %s5 = inlined_call_operand.vmem [shape: f32[32,1], index: 5, kind: input, shape index: {}]
  %s6 = inlined_call_operand.vmem [shape: f32[32,16], index: 6, kind: input, shape index: {}]
  %s7 = inlined_call_operand.vmem [shape: f32[16,1], index: 7, kind: input, shape index: {}]
  %s8 = inlined_call_operand.hbm [shape: f32[2,32,256], index: 8, kind: output, shape index: {}]
  %s9 = sld [smem:[#allocation0]]
  $region69: #{tpu_custom_call.1} parent=0
    _
  %s11 = ssub.s32 1, %s9
  %s12 = scalar_select 0, %s11, %s9
  $region1: #{tpu_custom_call.1} parent=0
    #allocation2 [shape = 'u8[65536]{0}', space=vmem, size = 0x10000, scoped, tag = 'input window, operand 1']
    #allocation3 [shape = 's32[2]{0}', space=sflag, size = 0x8, scoped, tag = 'scoped memory for tpu_custom_call.1']
    #allocation4 [shape = 's32[2]{0}', space=sflag, size = 0x8, scoped, tag = 'scoped memory for tpu_custom_call.1']
    #allocation5 [shape = 'u8[65536]{0}', space=vmem, size = 0x10000, scoped, tag = 'output window, operand 0']
    %13 = vsyncpa [#allocation3], 0
    %s14 = scalar_lea.sflag [#allocation3], 1
    %15 = vsyncpa %s14, 0
    %16 = vsyncpa [#allocation4], 0
    %s17 = scalar_lea.sflag [#allocation4], 1
    %18 = vsyncpa %s17, 0
    loop: start=0, step=1, limit=4
    $region2: #{tpu_custom_call.1} parent=1 // loop_pre_header
      _
    $region3: #{tpu_custom_call.1} parent=1 // loop_header
      %s20 = sphi 0, %s24
      %p21 = scmp.ge.s32.totalorder %s20, 4
      %s30 = sphi 0, %s32
      %s33 = sphi 0, %s30
      %s34 = sphi 0, %s33
      %s50 = sphi 0, %s34
      %s56 = sphi 0, %s58
      %s59 = sphi 0, %s56
      %s60 = sphi 0, %s59
      %s76 = sphi 0, %s60
      %s80 = sphi 0, %s80
      %s82 = sphi 0, %s80
      %s83 = sphi 0, %s82
      %s97 = sphi 0, %s83
      %s101 = sphi 0, %s101
      %s103 = sphi 0, %s101
      %s104 = sphi 0, %s103
      %s118 = sphi 0, %s104
      %s122 = sphi 0, %s122
      %s124 = sphi 0, %s122
      %s125 = sphi 0, %s124
      %s139 = sphi 0, %s125
      %s143 = sphi 0, %s143
      %s145 = sphi 0, %s143
      %s146 = sphi 0, %s145
      %s160 = sphi 0, %s146
      %s164 = sphi 0, %s164
      %s166 = sphi 0, %s164
      %s167 = sphi 0, %s166
      %s181 = sphi 0, %s167
      %s185 = sphi 0, %s185
      %s187 = sphi 0, %s185
      %s188 = sphi 0, %s187
      %s202 = sphi 0, %s188
      %s208 = sphi 0, %s210
      %s211 = sphi 0, %s208
      %s212 = sphi 0, %s211
      %s228 = sphi 0, %s212
    $region4: #{tpu_custom_call.1} parent=1 // loop_header_branch
      %23 = sbr.rel (%p21) target = $region8
    $region5: #{tpu_custom_call.1} parent=1 // loop_body
      %s25 = ssub.s32 %s20, 1
      %s26 = ssub.s32 %s20, 2
      %s27 = sadd.s32 %s20, 1
      %s28 = ssub.s32 %s20, %s27
      %p29 = scmp.eq.s32.totalorder %s28, 0
      %s31 = sadd.s32 %s30, 1
      %s32 = scalar_select %p29, %s30, %s31
      %p35 = pneg %p29
      %p36 = scmp.eq.s32.totalorder %s20, 1
      %p37 = por %p35, %p36
      %p38 = scmp.ne.s32.totalorder %s30, %s33
      %p39 = scmp.eq.s32.totalorder %s20, 0
      %p40 = por %p38, %p39
      %p41 = scmp.ne.s32.totalorder %s30, %s33
      %p42 = scmp.eq.s32.totalorder %s25, 1
      %p43 = por %p41, %p42
      %p44 = scmp.ne.s32.totalorder %s33, %s34
      %p45 = scmp.eq.s32.totalorder %s25, 0
      %p46 = por %p44, %p45
      %p47 = scmp.ne.s32.totalorder %s33, %s34
      %p48 = scmp.eq.s32.totalorder %s26, 1
      %p49 = por %p47, %p48
      %p51 = scmp.ne.s32.totalorder %s34, %s50
      %p52 = scmp.eq.s32.totalorder %s26, 0
      %p53 = por %p51, %p52
      %s54 = ssub.s32 %s20, %s27
      %p55 = scmp.eq.s32.totalorder %s54, 0
      %s57 = sadd.s32 %s56, 1
      %s58 = scalar_select %p55, %s56, %s57
      %p61 = pneg %p55
      %p62 = scmp.eq.s32.totalorder %s20, 1
      %p63 = por %p61, %p62
      %p64 = scmp.ne.s32.totalorder %s56, %s59
      %p65 = scmp.eq.s32.totalorder %s20, 0
      %p66 = por %p64, %p65
      %p67 = scmp.ne.s32.totalorder %s56, %s59
      %p68 = scmp.eq.s32.totalorder %s25, 1
      %p69 = por %p67, %p68
      %p70 = scmp.ne.s32.totalorder %s59, %s60
      %p71 = scmp.eq.s32.totalorder %s25, 0
      %p72 = por %p70, %p71
      %p73 = scmp.ne.s32.totalorder %s59, %s60
      %p74 = scmp.eq.s32.totalorder %s26, 1
      %p75 = por %p73, %p74
      %p77 = scmp.ne.s32.totalorder %s60, %s76
      %p78 = scmp.eq.s32.totalorder %s26, 0
      %p79 = por %p77, %p78
      %s81 = sadd.s32 %s80, 1
      %p84 = scmp.eq.s32.totalorder %s20, 1
      %p85 = scmp.ne.s32.totalorder %s80, %s82
      %p86 = scmp.eq.s32.totalorder %s20, 0
      %p87 = por %p85, %p86
      %p88 = scmp.ne.s32.totalorder %s80, %s82
      %p89 = scmp.eq.s32.totalorder %s25, 1
      %p90 = por %p88, %p89
      %p91 = scmp.ne.s32.totalorder %s82, %s83
      %p92 = scmp.eq.s32.totalorder %s25, 0
      %p93 = por %p91, %p92
      %p94 = scmp.ne.s32.totalorder %s82, %s83
      %p95 = scmp.eq.s32.totalorder %s26, 1
      %p96 = por %p94, %p95
      %p98 = scmp.ne.s32.totalorder %s83, %s97
      %p99 = scmp.eq.s32.totalorder %s26, 0
      %p100 = por %p98, %p99
      %s102 = sadd.s32 %s101, 1
      %p105 = scmp.eq.s32.totalorder %s20, 1
      %p106 = scmp.ne.s32.totalorder %s101, %s103
      %p107 = scmp.eq.s32.totalorder %s20, 0
      %p108 = por %p106, %p107
      %p109 = scmp.ne.s32.totalorder %s101, %s103
      %p110 = scmp.eq.s32.totalorder %s25, 1
      %p111 = por %p109, %p110
      %p112 = scmp.ne.s32.totalorder %s103, %s104
      %p113 = scmp.eq.s32.totalorder %s25, 0
      %p114 = por %p112, %p113
      %p115 = scmp.ne.s32.totalorder %s103, %s104
      %p116 = scmp.eq.s32.totalorder %s26, 1
      %p117 = por %p115, %p116
      %p119 = scmp.ne.s32.totalorder %s104, %s118
      %p120 = scmp.eq.s32.totalorder %s26, 0
      %p121 = por %p119, %p120
      %s123 = sadd.s32 %s122, 1
      %p126 = scmp.eq.s32.totalorder %s20, 1
      %p127 = scmp.ne.s32.totalorder %s122, %s124
      %p128 = scmp.eq.s32.totalorder %s20, 0
      %p129 = por %p127, %p128
      %p130 = scmp.ne.s32.totalorder %s122, %s124
      %p131 = scmp.eq.s32.totalorder %s25, 1
      %p132 = por %p130, %p131
      %p133 = scmp.ne.s32.totalorder %s124, %s125
      %p134 = scmp.eq.s32.totalorder %s25, 0
      %p135 = por %p133, %p134
      %p136 = scmp.ne.s32.totalorder %s124, %s125
      %p137 = scmp.eq.s32.totalorder %s26, 1
      %p138 = por %p136, %p137
      %p140 = scmp.ne.s32.totalorder %s125, %s139
      %p141 = scmp.eq.s32.totalorder %s26, 0
      %p142 = por %p140, %p141
      %s144 = sadd.s32 %s143, 1
      %p147 = scmp.eq.s32.totalorder %s20, 1
      %p148 = scmp.ne.s32.totalorder %s143, %s145
      %p149 = scmp.eq.s32.totalorder %s20, 0
      %p150 = por %p148, %p149
      %p151 = scmp.ne.s32.totalorder %s143, %s145
      %p152 = scmp.eq.s32.totalorder %s25, 1
      %p153 = por %p151, %p152
      %p154 = scmp.ne.s32.totalorder %s145, %s146
      %p155 = scmp.eq.s32.totalorder %s25, 0
      %p156 = por %p154, %p155
      %p157 = scmp.ne.s32.totalorder %s145, %s146
      %p158 = scmp.eq.s32.totalorder %s26, 1
      %p159 = por %p157, %p158
      %p161 = scmp.ne.s32.totalorder %s146, %s160
      %p162 = scmp.eq.s32.totalorder %s26, 0
      %p163 = por %p161, %p162
      %s165 = sadd.s32 %s164, 1
      %p168 = scmp.eq.s32.totalorder %s20, 1
      %p169 = scmp.ne.s32.totalorder %s164, %s166
      %p170 = scmp.eq.s32.totalorder %s20, 0
      %p171 = por %p169, %p170
      %p172 = scmp.ne.s32.totalorder %s164, %s166
      %p173 = scmp.eq.s32.totalorder %s25, 1
      %p174 = por %p172, %p173
      %p175 = scmp.ne.s32.totalorder %s166, %s167
      %p176 = scmp.eq.s32.totalorder %s25, 0
      %p177 = por %p175, %p176
      %p178 = scmp.ne.s32.totalorder %s166, %s167
      %p179 = scmp.eq.s32.totalorder %s26, 1
      %p180 = por %p178, %p179
      %p182 = scmp.ne.s32.totalorder %s167, %s181
      %p183 = scmp.eq.s32.totalorder %s26, 0
      %p184 = por %p182, %p183
      %s186 = sadd.s32 %s185, 1
      %p189 = scmp.eq.s32.totalorder %s20, 1
      %p190 = scmp.ne.s32.totalorder %s185, %s187
      %p191 = scmp.eq.s32.totalorder %s20, 0
      %p192 = por %p190, %p191
      %p193 = scmp.ne.s32.totalorder %s185, %s187
      %p194 = scmp.eq.s32.totalorder %s25, 1
      %p195 = por %p193, %p194
      %p196 = scmp.ne.s32.totalorder %s187, %s188
      %p197 = scmp.eq.s32.totalorder %s25, 0
      %p198 = por %p196, %p197
      %p199 = scmp.ne.s32.totalorder %s187, %s188
      %p200 = scmp.eq.s32.totalorder %s26, 1
      %p201 = por %p199, %p200
      %p203 = scmp.ne.s32.totalorder %s188, %s202
      %p204 = scmp.eq.s32.totalorder %s26, 0
      %p205 = por %p203, %p204
      %s206 = ssub.s32 %s20, %s27
      %p207 = scmp.eq.s32.totalorder %s206, 0
      %s209 = sadd.s32 %s208, 1
      %s210 = scalar_select %p207, %s208, %s209
      %p213 = pneg %p207
      %p214 = scmp.eq.s32.totalorder %s20, 1
      %p215 = por %p213, %p214
      %p216 = scmp.ne.s32.totalorder %s208, %s211
      %p217 = scmp.eq.s32.totalorder %s20, 0
      %p218 = por %p216, %p217
      %p219 = scmp.ne.s32.totalorder %s208, %s211
      %p220 = scmp.eq.s32.totalorder %s25, 1
      %p221 = por %p219, %p220
      %p222 = scmp.ne.s32.totalorder %s211, %s212
      %p223 = scmp.eq.s32.totalorder %s25, 0
      %p224 = por %p222, %p223
      %p225 = scmp.ne.s32.totalorder %s211, %s212
      %p226 = scmp.eq.s32.totalorder %s26, 1
      %p227 = por %p225, %p226
      %p229 = scmp.ne.s32.totalorder %s212, %s228
      %p230 = scmp.eq.s32.totalorder %s26, 0
      %p231 = por %p229, %p230
      %p232 = scmp.le.s32.totalorder 1, %s20
      %p233 = scmp.lt.s32.totalorder %s20, 3
      %p234 = pnand %p232, %p233
      %p235 = pneg %p234
      // Predicated region
      $region9: #{tpu_custom_call.1} parent=5 // pred_check
        _
      $region10: #{tpu_custom_call.1} parent=5 // pred_check_branch
        %237 = sbr.rel (%p234) target = $region12
      $region11: #{tpu_custom_call.1} parent=5 // pred_region
        %s238 = ssub.s32 %s20, 1
        // Predicated region
        $region13: #{tpu_custom_call.1} parent=11 // pred_check
          %p239 = pneg %p93
        $region14: #{tpu_custom_call.1} parent=11 // pred_check_branch
          %241 = sbr.rel (%p239) target = $region16
        $region15: #{tpu_custom_call.1} parent=11 // pred_region
          _
        $region16: #{tpu_custom_call.1} parent=11 // pred_fallthru
          _
        // Predicated region
        $region17: #{tpu_custom_call.1} parent=11 // pred_check
          %p242 = pneg %p114
        $region18: #{tpu_custom_call.1} parent=11 // pred_check_branch
          %244 = sbr.rel (%p242) target = $region20
        $region19: #{tpu_custom_call.1} parent=11 // pred_region
          _
        $region20: #{tpu_custom_call.1} parent=11 // pred_fallthru
          _
        // Predicated region
        $region21: #{tpu_custom_call.1} parent=11 // pred_check
          %p245 = pneg %p135
        $region22: #{tpu_custom_call.1} parent=11 // pred_check_branch
          %247 = sbr.rel (%p245) target = $region24
        $region23: #{tpu_custom_call.1} parent=11 // pred_region
          _
        $region24: #{tpu_custom_call.1} parent=11 // pred_fallthru
          _
        // Predicated region
        $region25: #{tpu_custom_call.1} parent=11 // pred_check
          %p248 = pneg %p156
        $region26: #{tpu_custom_call.1} parent=11 // pred_check_branch
          %250 = sbr.rel (%p248) target = $region28
        $region27: #{tpu_custom_call.1} parent=11 // pred_region
          _
        $region28: #{tpu_custom_call.1} parent=11 // pred_fallthru
          _
        // Predicated region
        $region29: #{tpu_custom_call.1} parent=11 // pred_check
          %p251 = pneg %p177
        $region30: #{tpu_custom_call.1} parent=11 // pred_check_branch
          %253 = sbr.rel (%p251) target = $region32
        $region31: #{tpu_custom_call.1} parent=11 // pred_region
          _
        $region32: #{tpu_custom_call.1} parent=11 // pred_fallthru
          _
        // Predicated region
        $region33: #{tpu_custom_call.1} parent=11 // pred_check
          %p254 = pneg %p198
        $region34: #{tpu_custom_call.1} parent=11 // pred_check_branch
          %256 = sbr.rel (%p254) target = $region36
        $region35: #{tpu_custom_call.1} parent=11 // pred_region
          _
        $region36: #{tpu_custom_call.1} parent=11 // pred_fallthru
          _
      $region12: #{tpu_custom_call.1} parent=5 // pred_fallthru
        _
      %p257 = scmp.lt.s32.totalorder %s20, 2
      // Predicated region
      $region37: #{tpu_custom_call.1} parent=5 // pred_check
        %p258 = pneg %p257
      $region38: #{tpu_custom_call.1} parent=5 // pred_check_branch
        %260 = sbr.rel (%p258) target = $region40
      $region39: #{tpu_custom_call.1} parent=5 // pred_region
        // Predicated region
        $region41: #{tpu_custom_call.1} parent=39 // pred_check
          %p261 = pneg %p40
        $region42: #{tpu_custom_call.1} parent=39 // pred_check_branch
          %263 = sbr.rel (%p261) target = $region44
        $region43: #{tpu_custom_call.1} parent=39 // pred_region
          %p264 = scmp.lt.s32.totalorder %s20, 1
          %s265 = scalar_select %p264, %s20, 1
          %s266 = smul.addr %s265, 8
          %s267 = smul.addr %s266, 8
          %s268 = scalar_lea.vmem %s0, %s267
        $region44: #{tpu_custom_call.1} parent=39 // pred_fallthru
          _
        // Predicated region
        $region45: #{tpu_custom_call.1} parent=39 // pred_check
          %p269 = pneg %p66
        $region46: #{tpu_custom_call.1} parent=39 // pred_check_branch
          %271 = sbr.rel (%p269) target = $region48
        $region47: #{tpu_custom_call.1} parent=39 // pred_region
          %s272 = sand.u32 %s56, 1
          %s273 = scalar_lea.sflag [#allocation3], %s272
          %s274 = sand.u32 %s56, 1
          %s275 = smul.addr %s274, 64
          %s276 = scalar_lea.vmem [#allocation2], %s275
          %s278 = ssub.s32 1024, 1024
          %279 = vsyncadd %s273, %s278
          %s280 = smul.addr %s20, 8
          %s281 = smul.addr %s280, 128
          %s282 = scalar_lea.hbm %s1, %s281
          %s283 = sshll.u32 %s276, 4
          %s284 = int_to_ptr.vmem [resolvable:$true] %s283
          %289 = dma.hbm_to_vmem [thread:$0]  %s282, 1024, %s284, %s273, 256, 256, 16
        $region48: #{tpu_custom_call.1} parent=39 // pred_fallthru
          _
      $region40: #{tpu_custom_call.1} parent=5 // pred_fallthru
        _
      %p290 = scmp.le.s32.totalorder 1, %s20
      %p291 = scmp.lt.s32.totalorder %s20, 3
      %p292 = pnand %p290, %p291
      %p293 = pneg %p292
      // Predicated region
      $region49: #{tpu_custom_call.1} parent=5 // pred_check
        _
      $region50: #{tpu_custom_call.1} parent=5 // pred_check_branch
        %295 = sbr.rel (%p292) target = $region52
      $region51: #{tpu_custom_call.1} parent=5 // pred_region
        %s296 = ssub.s32 %s20, 1
        %s297 = sand.u32 %s59, 1
        %s298 = scalar_lea.sflag [#allocation3], %s297
        %s299 = sand.u32 %s59, 1
        %s300 = smul.addr %s299, 64
        %s301 = scalar_lea.vmem [#allocation2], %s300
        // Predicated region
        $region53: #{tpu_custom_call.1} parent=51 // pred_check
          %p302 = pneg %p72
        $region54: #{tpu_custom_call.1} parent=51 // pred_check_branch
          %304 = sbr.rel (%p302) target = $region56
        $region55: #{tpu_custom_call.1} parent=51 // pred_region
          %305 = dma.done %s298, 1024
        $region56: #{tpu_custom_call.1} parent=51 // pred_fallthru
          _
        %p306 = scmp.lt.s32.totalorder %s25, 1
        %s307 = scalar_select %p306, %s25, 1
        %s308 = smul.addr %s307, 8
        %s309 = smul.addr %s308, 8
        %s310 = scalar_lea.vmem %s0, %s309
        %p311 = pneg %p46
        %p312 = pneg %p43
        %s313 = sand.u32 %s59, 1
        %s314 = scalar_lea.sflag [#allocation3], %s313
        %s315 = sand.u32 %s59, 1
        %s316 = smul.addr %s315, 64
        %s317 = scalar_lea.vmem [#allocation2], %s316
        %p318 = pneg %p72
        %p319 = pneg %p69
        %p320 = pneg %p93
        %p321 = pneg %p90
        %p322 = pneg %p114
        %p323 = pneg %p111
        %p324 = pneg %p135
        %p325 = pneg %p132
        %p326 = pneg %p156
        %p327 = pneg %p153
        %p328 = pneg %p177
        %p329 = pneg %p174
        %p330 = pneg %p198
        %p331 = pneg %p195
        %p332 = pneg %p224
        %p333 = pneg %p221
        %s334 = sand.u32 %s211, 1
        %s335 = scalar_lea.sflag [#allocation4], %s334
        %s336 = sand.u32 %s211, 1
        %s337 = smul.addr %s336, 64
        %s338 = scalar_lea.vmem [#allocation5], %s337
        %p339 = scmp.lt.s32.totalorder %s25, 1
        %s340 = scalar_select %p339, %s25, 1
        %s341 = smul.addr %s340, 8
        %s342 = smul.addr %s341, 8
        %s343 = scalar_lea.vmem %s0, %s342
        %v344 = vld [vmem:[%s2] sm:$0xff]
        %v345 = vld [vmem:[%s2 + $0x8] sm:$0xff]
        %v346 = vld [vmem:[%s2 + $0x10] sm:$0xff]
        %v347 = vld [vmem:[%s2 + $0x18] sm:$0xff]
        %v348 = vld [vmem:[%s3] sm:$0x1]
        %v349 = vld [vmem:[%s4] sm:$0xff]
        %v350 = vld [vmem:[%s4 + $0x8] sm:$0xff]
        %v351 = vld [vmem:[%s4 + $0x10] sm:$0xff]
        %v352 = vld [vmem:[%s4 + $0x18] sm:$0xff]
        %v353 = vld [vmem:[%s5] sm:$0xff]
        %v354 = vld [vmem:[%s5 + $0x8] sm:$0xff]
        %v355 = vld [vmem:[%s5 + $0x10] sm:$0xff]
        %v356 = vld [vmem:[%s5 + $0x18] sm:$0xff]
        %v357 = vld [vmem:[%s6] sm:$0xff]
        %v358 = vld [vmem:[%s6 + $0x8] sm:$0xff]
        %v359 = vld [vmem:[%s6 + $0x10] sm:$0xff]
        %v360 = vld [vmem:[%s6 + $0x18] sm:$0xff]
        %v361 = vld [vmem:[%s7] sm:$0xff]
        %v362 = vld [vmem:[%s7 + $0x8] sm:$0xff]
        %v363 = vld [vmem:[%s343] sm:$0xff]
        %v364 = vld [vmem:[%s343 + $0x8] sm:$0xff]
        %v365 = vld [vmem:[%s343 + $0x10] sm:$0xff]
        %v366 = vld [vmem:[%s343 + $0x18] sm:$0xff]
        %v367 = vld [vmem:[%s343 + $0x20] sm:$0xff]
        %v368 = vld [vmem:[%s343 + $0x28] sm:$0xff]
        %v369 = vld [vmem:[%s343 + $0x30] sm:$0xff]
        %v370 = vld [vmem:[%s343 + $0x38] sm:$0xff]
        %v371 = vadd.f32 %v363, %v364
        %372 = vadd.xlane.f32.xlu0 %v371
        %v373 = vpop.xlane.xlu0 %372
        %v374 = vadd.f32 %v365, %v366
        %375 = vadd.xlane.f32.xlu0 %v374
        %v376 = vpop.xlane.xlu0 %375
        %v377 = vadd.f32 %v367, %v368
        %378 = vadd.xlane.f32.xlu0 %v377
        %v379 = vpop.xlane.xlu0 %378
        %v380 = vadd.f32 %v369, %v370
        %381 = vadd.xlane.f32.xlu0 %v380
        %v382 = vpop.xlane.xlu0 %381
        %v383 = vmul.f32 %v373, 0.00390625
        %v384 = vmul.f32 %v376, 0.00390625
        %v385 = vmul.f32 %v379, 0.00390625
        %v386 = vmul.f32 %v382, 0.00390625
        %v387 = vmul.f32 %v344, %v383
        %v388 = vmul.f32 %v345, %v384
        %v389 = vmul.f32 %v346, %v385
        %v390 = vmul.f32 %v347, %v386
        %vm391 = vcmask 15360
        %v392 = vsel %vm391, %v387, 0.0
        %v393 = vsel %vm391, %v388, 0.0
        %v394 = vadd.f32 %v392, %v393
        %v395 = vsel %vm391, %v389, 0.0
        %v396 = vadd.f32 %v394, %v395
        %v397 = vsel %vm391, %v390, 0.0
        %v398 = vadd.f32 %v396, %v397
        %v399 = vrot.slane %v398, 4
        %v400 = vadd.f32 %v398, %v399
        %v401 = vrot.slane %v400, 2
        %v402 = vadd.f32 %v400, %v401
        %v403 = vrot.slane %v402, 1
        %v404 = vadd.f32 %v402, %v403
        %v405 = vadd.f32 %v404, %v348
        %v406 = vmax.f32 %v405, 0.0
        %v407 = vlaneseq
        %v408 = vshrl.u32 %v407, 7
        %v409 = vsub.s32 0, %v408
        %v410 = vrot.slane %v406, %v409
        %v411 = vmul.f32 %v349, %v410
        %v412 = vmul.f32 %v350, %v410
        %v413 = vmul.f32 %v351, %v410
        %v414 = vmul.f32 %v352, %v410
        %v415 = vsel %vm391, %v411, 0.0
        %416 = vadd.xlane.f32.xlu0 %v415
        %v417 = vpop.xlane.xlu0 %416
        %v418 = vsel %vm391, %v412, 0.0
        %419 = vadd.xlane.f32.xlu0 %v418
        %v420 = vpop.xlane.xlu0 %419
        %v421 = vsel %vm391, %v413, 0.0
        %422 = vadd.xlane.f32.xlu0 %v421
        %v423 = vpop.xlane.xlu0 %422
        %v424 = vsel %vm391, %v414, 0.0
        %425 = vadd.xlane.f32.xlu0 %v424
        %v426 = vpop.xlane.xlu0 %425
        %v427 = vadd.f32 %v417, %v353
        %v428 = vadd.f32 %v420, %v354
        %v429 = vadd.f32 %v423, %v355
        %v430 = vadd.f32 %v426, %v356
        %v431 = vxor.u32 %v427, 2147483648
        %v432 = vxor.u32 %v428, 2147483648
        %v433 = vxor.u32 %v429, 2147483648
        %v434 = vxor.u32 %v430, 2147483648
        %v435 = vmul.f32 %v431, 1.442695
        %v436 = vpow.pop %v435
        %v437 = vmul.f32 %v432, 1.442695
        %v438 = vpow.pop %v437
        %v439 = vmul.f32 %v433, 1.442695
        %v440 = vpow.pop %v439
        %v441 = vmul.f32 %v434, 1.442695
        %v442 = vpow.pop %v441
        %v443 = vadd.f32 %v436, 1.0
        %v444 = vadd.f32 %v438, 1.0
        %v445 = vadd.f32 %v440, 1.0
        %v446 = vadd.f32 %v442, 1.0
        %v447 = vrcp.pop %v443
        %v448 = vmul.f32 1.0, %v447
        %v449 = vrcp.pop %v444
        %v450 = vmul.f32 1.0, %v449
        %v451 = vrcp.pop %v445
        %v452 = vmul.f32 1.0, %v451
        %v453 = vrcp.pop %v446
        %v454 = vmul.f32 1.0, %v453
        %456 = vset.pattern.permute.xlu0 0
        %457 = vperm.xlu0 %456, %v448
        %v458 = vpop.permute.xlu0 %457
        %461 = vset.pattern.permute.xlu0 0
        %462 = vperm.xlu0 %461, %v450
        %v463 = vpop.permute.xlu0 %462
        %466 = vset.pattern.permute.xlu0 0
        %467 = vperm.xlu0 %466, %v452
        %v468 = vpop.permute.xlu0 %467
        %471 = vset.pattern.permute.xlu0 0
        %472 = vperm.xlu0 %471, %v454
        %v473 = vpop.permute.xlu0 %472
        %v475 = vmul.f32 %v357, %v458
        %v476 = vmul.f32 %v358, %v463
        %v477 = vmul.f32 %v359, %v468
        %v478 = vmul.f32 %v360, %v473
        %480 = vset.pattern.permute.xlu0 0
        %481 = vperm.xlu0 %480, %v361
        %v482 = vpop.permute.xlu0 %481
        %485 = vset.pattern.permute.xlu0 0
        %486 = vperm.xlu0 %485, %v362
        %v487 = vpop.permute.xlu0 %486
        %489 = vxpose.xlu0.b32.start [1/16] %v475, 128
        %490 = vxpose.xlu0.b32.cont [2/16] %v476, 128
        %491 = vxpose.xlu0.b32.cont [3/16] %v477, 128
        %492 = vxpose.xlu0.b32.cont [4/16] %v478, 128
        %493 = vxpose.xlu0.b32.cont [5/16] 0.0, 128
        %494 = vxpose.xlu0.b32.cont [6/16] 0.0, 128
        %495 = vxpose.xlu0.b32.cont [7/16] 0.0, 128
        %496 = vxpose.xlu0.b32.cont [8/16] 0.0, 128
        %497 = vxpose.xlu0.b32.cont [9/16] 0.0, 128
        %498 = vxpose.xlu0.b32.cont [10/16] 0.0, 128
        %499 = vxpose.xlu0.b32.cont [11/16] 0.0, 128
        %500 = vxpose.xlu0.b32.cont [12/16] 0.0, 128
        %501 = vxpose.xlu0.b32.cont [13/16] 0.0, 128
        %502 = vxpose.xlu0.b32.cont [14/16] 0.0, 128
        %503 = vxpose.xlu0.b32.cont [15/16] 0.0, 128
        %504 = vxpose.xlu0.b32.end [16/16] 0.0, 128
        %v505 = vpop.trf.xlu0
        %v506 = vpop.trf.xlu0
        %v507 = vpop.trf.xlu0
        %v508 = vpop.trf.xlu0
        %v509 = vpop.trf.xlu0
        %v510 = vpop.trf.xlu0
        %v511 = vpop.trf.xlu0
        %v512 = vpop.trf.xlu0
        %v513 = vpop.trf.xlu0
        %v514 = vpop.trf.xlu0
        %v515 = vpop.trf.xlu0
        %v516 = vpop.trf.xlu0
        %v517 = vpop.trf.xlu0
        %v518 = vpop.trf.xlu0
        %v519 = vpop.trf.xlu0
        %v520 = vpop.trf.xlu0
        %vm521 = vcmask 261120
        %v523 = vsel %vm521, %v505, 0
        %v526 = vsel %vm521, %v506, 0
        %528 = vmatprep.subr.mxu0 0.0
        %529 = vmatpush1.msra.mxu0 0.0
        %530 = vmatprep.subr.mxu0 0.0
        %531 = vmatpush1.msra.mxu0 0.0
        %532 = vmatprep.subr.mxu0 0.0
        %533 = vmatpush1.msra.mxu0 0.0
        %534 = vmatprep.subr.mxu0 0.0
        %535 = vmatpush1.msra.mxu0 0.0
        %536 = vmatprep.subr.mxu0 0.0
        %537 = vmatpush1.msra.mxu0 0.0
        %538 = vmatprep.subr.mxu0 0.0
        %539 = vmatpush1.msra.mxu0 0.0
        %540 = vmatprep.subr.mxu0 0.0
        %541 = vmatpush1.msra.mxu0 0.0
        %542 = vmatprep.subr.mxu0 0.0
        %543 = vmatpush1.msra.mxu0 0.0
        %544 = vmatprep.subr.mxu0 0.0
        %545 = vmatpush1.msra.mxu0 0.0
        %546 = vmatprep.subr.mxu0 0.0
        %547 = vmatpush1.msra.mxu0 0.0
        %548 = vmatprep.subr.mxu0 0.0
        %549 = vmatpush1.msra.mxu0 0.0
        %550 = vmatprep.subr.mxu0 0.0
        %551 = vmatpush1.msra.mxu0 0.0
        %552 = vmatprep.subr.mxu0 %v370
        %553 = vmatpush1.msra.mxu0 %v369
        %554 = vmatprep.subr.mxu0 %v368
        %555 = vmatpush1.msra.mxu0 %v367
        %556 = vmatprep.subr.mxu0 %v366
        %557 = vmatpush1.msra.mxu0 %v365
        %558 = vmatprep.subr.mxu0 %v364
        %559 = vmatpush1.msra.mxu0 %v363
        %560 = vmatprep.subr.mxu0 0.0
        %561 = vmatpush2.msra.mxu0 0.0
        %562 = vmatprep.subr.mxu0 0.0
        %563 = vmatpush2.msra.mxu0 0.0
        %564 = vmatprep.subr.mxu0 0.0
        %565 = vmatpush2.msra.mxu0 0.0
        %566 = vmatprep.subr.mxu0 0.0
        %567 = vmatpush2.msra.mxu0 0.0
        %568 = vmatprep.subr.mxu0 0.0
        %569 = vmatpush2.msra.mxu0 0.0
        %570 = vmatprep.subr.mxu0 0.0
        %571 = vmatpush2.msra.mxu0 0.0
        %572 = vmatprep.subr.mxu0 0.0
        %573 = vmatpush2.msra.mxu0 0.0
        %574 = vmatprep.subr.mxu0 0.0
        %575 = vmatpush2.msra.mxu0 0.0
        %576 = vmatprep.subr.mxu0 0.0
        %577 = vmatpush2.msra.mxu0 0.0
        %578 = vmatprep.subr.mxu0 0.0
        %579 = vmatpush2.msra.mxu0 0.0
        %580 = vmatprep.subr.mxu0 0.0
        %581 = vmatpush2.msra.mxu0 0.0
        %582 = vmatprep.subr.mxu0 0.0
        %583 = vmatpush2.msra.mxu0 0.0
        %584 = vmatprep.subr.mxu0 0.0
        %585 = vmatpush2.msra.mxu0 0.0
        %586 = vmatprep.subr.mxu0 0.0
        %587 = vmatpush2.msra.mxu0 0.0
        %588 = vmatprep.subr.mxu0 0.0
        %589 = vmatpush2.msra.mxu0 0.0
        %590 = vmatprep.subr.mxu0 0.0
        %591 = vmatpush2.msra.mxu0 0.0
        %592 = vmatprep.mubr.f32.mxu0 0.0
        %593 = vmatmul.mubr.f32.gmra.mxu0 %v523
        %v594 = vpop.f32.mrf.mxu0
        %v595 = vadd.f32 %v482, %v594
        %v596 = vpop.f32.mrf.mxu0
        %v597 = vadd.f32 %v482, %v596
        %598 = vmatprep.mubr.f32.mxu0 0.0
        %599 = vmatmul.mubr.f32.gmra.mxu0 %v526
        %v600 = vpop.f32.mrf.mxu0
        %v601 = vadd.f32 %v487, %v600
        %v602 = vpop.f32.mrf.mxu0
        %v603 = vadd.f32 %v487, %v602
        %604 = vdwg.mxu0
        %605 = vst [vmem:[%s338] sm:$0xff] %v595
        %606 = vst [vmem:[%s338 + $0x8] sm:$0xff] %v597
        %607 = vst [vmem:[%s338 + $0x10] sm:$0xff] %v601
        %608 = vst [vmem:[%s338 + $0x18] sm:$0xff] %v603
        %v609 = vld [vmem:[%s301] sm:$0xff]
        %v610 = vld [vmem:[%s301 + $0x8] sm:$0xff]
        %v611 = vld [vmem:[%s301 + $0x10] sm:$0xff]
        %v612 = vld [vmem:[%s301 + $0x18] sm:$0xff]
        %v613 = vld [vmem:[%s301 + $0x20] sm:$0xff]
        %v614 = vld [vmem:[%s301 + $0x28] sm:$0xff]
        %v615 = vld [vmem:[%s301 + $0x30] sm:$0xff]
        %v616 = vld [vmem:[%s301 + $0x38] sm:$0xff]
        %v617 = vadd.f32 %v609, %v610
        %618 = vadd.xlane.f32.xlu0 %v617
        %v619 = vpop.xlane.xlu0 %618
        %v620 = vadd.f32 %v611, %v612
        %621 = vadd.xlane.f32.xlu0 %v620
        %v622 = vpop.xlane.xlu0 %621
        %v623 = vadd.f32 %v613, %v614
        %624 = vadd.xlane.f32.xlu0 %v623
        %v625 = vpop.xlane.xlu0 %624
        %v626 = vadd.f32 %v615, %v616
        %627 = vadd.xlane.f32.xlu0 %v626
        %v628 = vpop.xlane.xlu0 %627
        %v629 = vmul.f32 %v619, 0.00390625
        %v630 = vmul.f32 %v622, 0.00390625
        %v631 = vmul.f32 %v625, 0.00390625
        %v632 = vmul.f32 %v628, 0.00390625
        %v633 = vmul.f32 %v344, %v629
        %v634 = vmul.f32 %v345, %v630
        %v635 = vmul.f32 %v346, %v631
        %v636 = vmul.f32 %v347, %v632
        %v637 = vsel %vm391, %v633, 0.0
        %v638 = vsel %vm391, %v634, 0.0
        %v639 = vadd.f32 %v637, %v638
        %v640 = vsel %vm391, %v635, 0.0
        %v641 = vadd.f32 %v639, %v640
        %v642 = vsel %vm391, %v636, 0.0
        %v643 = vadd.f32 %v641, %v642
        %v644 = vrot.slane %v643, 4
        %v645 = vadd.f32 %v643, %v644
        %v646 = vrot.slane %v645, 2
        %v647 = vadd.f32 %v645, %v646
        %v648 = vrot.slane %v647, 1
        %v649 = vadd.f32 %v647, %v648
        %v650 = vadd.f32 %v649, %v348
        %v651 = vmax.f32 %v650, 0.0
        %v652 = vlaneseq
        %v653 = vshrl.u32 %v652, 7
        %v654 = vsub.s32 0, %v653
        %v655 = vrot.slane %v651, %v654
        %v656 = vmul.f32 %v349, %v655
        %v657 = vmul.f32 %v350, %v655
        %v658 = vmul.f32 %v351, %v655
        %v659 = vmul.f32 %v352, %v655
        %v660 = vsel %vm391, %v656, 0.0
        %661 = vadd.xlane.f32.xlu0 %v660
        %v662 = vpop.xlane.xlu0 %661
        %v663 = vsel %vm391, %v657, 0.0
        %664 = vadd.xlane.f32.xlu0 %v663
        %v665 = vpop.xlane.xlu0 %664
        %v666 = vsel %vm391, %v658, 0.0
        %667 = vadd.xlane.f32.xlu0 %v666
        %v668 = vpop.xlane.xlu0 %667
        %v669 = vsel %vm391, %v659, 0.0
        %670 = vadd.xlane.f32.xlu0 %v669
        %v671 = vpop.xlane.xlu0 %670
        %v672 = vadd.f32 %v662, %v353
        %v673 = vadd.f32 %v665, %v354
        %v674 = vadd.f32 %v668, %v355
        %v675 = vadd.f32 %v671, %v356
        %v676 = vxor.u32 %v672, 2147483648
        %v677 = vxor.u32 %v673, 2147483648
        %v678 = vxor.u32 %v674, 2147483648
        %v679 = vxor.u32 %v675, 2147483648
        %v680 = vmul.f32 %v676, 1.442695
        %v681 = vpow.pop %v680
        %v682 = vmul.f32 %v677, 1.442695
        %v683 = vpow.pop %v682
        %v684 = vmul.f32 %v678, 1.442695
        %v685 = vpow.pop %v684
        %v686 = vmul.f32 %v679, 1.442695
        %v687 = vpow.pop %v686
        %v688 = vadd.f32 %v681, 1.0
        %v689 = vadd.f32 %v683, 1.0
        %v690 = vadd.f32 %v685, 1.0
        %v691 = vadd.f32 %v687, 1.0
        %v692 = vrcp.pop %v688
        %v693 = vmul.f32 1.0, %v692
        %v694 = vrcp.pop %v689
        %v695 = vmul.f32 1.0, %v694
        %v696 = vrcp.pop %v690
        %v697 = vmul.f32 1.0, %v696
        %v698 = vrcp.pop %v691
        %v699 = vmul.f32 1.0, %v698
        %701 = vset.pattern.permute.xlu0 0
        %702 = vperm.xlu0 %701, %v693
        %v703 = vpop.permute.xlu0 %702
        %706 = vset.pattern.permute.xlu0 0
        %707 = vperm.xlu0 %706, %v695
        %v708 = vpop.permute.xlu0 %707
        %711 = vset.pattern.permute.xlu0 0
        %712 = vperm.xlu0 %711, %v697
        %v713 = vpop.permute.xlu0 %712
        %716 = vset.pattern.permute.xlu0 0
        %717 = vperm.xlu0 %716, %v699
        %v718 = vpop.permute.xlu0 %717
        %v720 = vmul.f32 %v357, %v703
        %v721 = vmul.f32 %v358, %v708
        %v722 = vmul.f32 %v359, %v713
        %v723 = vmul.f32 %v360, %v718
        %724 = vxpose.xlu0.b32.start [1/16] %v720, 128
        %725 = vxpose.xlu0.b32.cont [2/16] %v721, 128
        %726 = vxpose.xlu0.b32.cont [3/16] %v722, 128
        %727 = vxpose.xlu0.b32.cont [4/16] %v723, 128
        %728 = vxpose.xlu0.b32.cont [5/16] 0.0, 128
        %729 = vxpose.xlu0.b32.cont [6/16] 0.0, 128
        %730 = vxpose.xlu0.b32.cont [7/16] 0.0, 128
        %731 = vxpose.xlu0.b32.cont [8/16] 0.0, 128
        %732 = vxpose.xlu0.b32.cont [9/16] 0.0, 128
        %733 = vxpose.xlu0.b32.cont [10/16] 0.0, 128
        %734 = vxpose.xlu0.b32.cont [11/16] 0.0, 128
        %735 = vxpose.xlu0.b32.cont [12/16] 0.0, 128
        %736 = vxpose.xlu0.b32.cont [13/16] 0.0, 128
        %737 = vxpose.xlu0.b32.cont [14/16] 0.0, 128
        %738 = vxpose.xlu0.b32.cont [15/16] 0.0, 128
        %739 = vxpose.xlu0.b32.end [16/16] 0.0, 128
        %v740 = vpop.trf.xlu0
        %v741 = vpop.trf.xlu0
        %v742 = vpop.trf.xlu0
        %v743 = vpop.trf.xlu0
        %v744 = vpop.trf.xlu0
        %v745 = vpop.trf.xlu0
        %v746 = vpop.trf.xlu0
        %v747 = vpop.trf.xlu0
        %v748 = vpop.trf.xlu0
        %v749 = vpop.trf.xlu0
        %v750 = vpop.trf.xlu0
        %v751 = vpop.trf.xlu0
        %v752 = vpop.trf.xlu0
        %v753 = vpop.trf.xlu0
        %v754 = vpop.trf.xlu0
        %v755 = vpop.trf.xlu0
        %v757 = vsel %vm521, %v740, 0
        %v760 = vsel %vm521, %v741, 0
        %762 = vmatprep.subr.mxu0 0.0
        %763 = vmatpush1.msra.mxu0 0.0
        %764 = vmatprep.subr.mxu0 0.0
        %765 = vmatpush1.msra.mxu0 0.0
        %766 = vmatprep.subr.mxu0 0.0
        %767 = vmatpush1.msra.mxu0 0.0
        %768 = vmatprep.subr.mxu0 0.0
        %769 = vmatpush1.msra.mxu0 0.0
        %770 = vmatprep.subr.mxu0 0.0
        %771 = vmatpush1.msra.mxu0 0.0
        %772 = vmatprep.subr.mxu0 0.0
        %773 = vmatpush1.msra.mxu0 0.0
        %774 = vmatprep.subr.mxu0 0.0
        %775 = vmatpush1.msra.mxu0 0.0
        %776 = vmatprep.subr.mxu0 0.0
        %777 = vmatpush1.msra.mxu0 0.0
        %778 = vmatprep.subr.mxu0 0.0
        %779 = vmatpush1.msra.mxu0 0.0
        %780 = vmatprep.subr.mxu0 0.0
        %781 = vmatpush1.msra.mxu0 0.0
        %782 = vmatprep.subr.mxu0 0.0
        %783 = vmatpush1.msra.mxu0 0.0
        %784 = vmatprep.subr.mxu0 0.0
        %785 = vmatpush1.msra.mxu0 0.0
        %786 = vmatprep.subr.mxu0 %v616
        %787 = vmatpush1.msra.mxu0 %v615
        %788 = vmatprep.subr.mxu0 %v614
        %789 = vmatpush1.msra.mxu0 %v613
        %790 = vmatprep.subr.mxu0 %v612
        %791 = vmatpush1.msra.mxu0 %v611
        %792 = vmatprep.subr.mxu0 %v610
        %793 = vmatpush1.msra.mxu0 %v609
        %794 = vmatprep.subr.mxu0 0.0
        %795 = vmatpush2.msra.mxu0 0.0
        %796 = vmatprep.subr.mxu0 0.0
        %797 = vmatpush2.msra.mxu0 0.0
        %798 = vmatprep.subr.mxu0 0.0
        %799 = vmatpush2.msra.mxu0 0.0
        %800 = vmatprep.subr.mxu0 0.0
        %801 = vmatpush2.msra.mxu0 0.0
        %802 = vmatprep.subr.mxu0 0.0
        %803 = vmatpush2.msra.mxu0 0.0
        %804 = vmatprep.subr.mxu0 0.0
        %805 = vmatpush2.msra.mxu0 0.0
        %806 = vmatprep.subr.mxu0 0.0
        %807 = vmatpush2.msra.mxu0 0.0
        %808 = vmatprep.subr.mxu0 0.0
        %809 = vmatpush2.msra.mxu0 0.0
        %810 = vmatprep.subr.mxu0 0.0
        %811 = vmatpush2.msra.mxu0 0.0
        %812 = vmatprep.subr.mxu0 0.0
        %813 = vmatpush2.msra.mxu0 0.0
        %814 = vmatprep.subr.mxu0 0.0
        %815 = vmatpush2.msra.mxu0 0.0
        %816 = vmatprep.subr.mxu0 0.0
        %817 = vmatpush2.msra.mxu0 0.0
        %818 = vmatprep.subr.mxu0 0.0
        %819 = vmatpush2.msra.mxu0 0.0
        %820 = vmatprep.subr.mxu0 0.0
        %821 = vmatpush2.msra.mxu0 0.0
        %822 = vmatprep.subr.mxu0 0.0
        %823 = vmatpush2.msra.mxu0 0.0
        %824 = vmatprep.subr.mxu0 0.0
        %825 = vmatpush2.msra.mxu0 0.0
        %826 = vmatprep.mubr.f32.mxu0 0.0
        %827 = vmatmul.mubr.f32.gmra.mxu0 %v757
        %v828 = vpop.f32.mrf.mxu0
        %v829 = vadd.f32 %v482, %v828
        %v830 = vpop.f32.mrf.mxu0
        %v831 = vadd.f32 %v482, %v830
        %832 = vmatprep.mubr.f32.mxu0 0.0
        %833 = vmatmul.mubr.f32.gmra.mxu0 %v760
        %v834 = vpop.f32.mrf.mxu0
        %v835 = vadd.f32 %v487, %v834
        %v836 = vpop.f32.mrf.mxu0
        %v837 = vadd.f32 %v487, %v836
        %838 = vdwg.mxu0
        %839 = vst [vmem:[%s338 + $0x20] sm:$0xff] %v829
        %840 = vst [vmem:[%s338 + $0x28] sm:$0xff] %v831
        %841 = vst [vmem:[%s338 + $0x30] sm:$0xff] %v835
        %842 = vst [vmem:[%s338 + $0x38] sm:$0xff] %v837
        %s843 = sand.u32 %s211, 1
        %s844 = scalar_lea.sflag [#allocation4], %s843
        %s845 = sand.u32 %s211, 1
        %s846 = smul.addr %s845, 64
        %s847 = scalar_lea.vmem [#allocation5], %s846
        // Predicated region
        $region57: #{tpu_custom_call.1} parent=51 // pred_check
          %p848 = pneg %p221
        $region58: #{tpu_custom_call.1} parent=51 // pred_check_branch
          %850 = sbr.rel (%p848) target = $region60
        $region59: #{tpu_custom_call.1} parent=51 // pred_region
          %s852 = ssub.s32 1024, 1024
          %853 = vsyncadd %s844, %s852
          %s854 = smul.addr %s25, 8
          %s855 = smul.addr %s854, 128
          %s856 = scalar_lea.hbm %s8, %s855
          %s857 = sshll.u32 %s847, 4
          %s858 = int_to_ptr.vmem [resolvable:$true] %s857
          %863 = dma.vmem_to_hbm [thread:$0]  %s858, 1024, %s856, %s844, 256, 256, 16
        $region60: #{tpu_custom_call.1} parent=51 // pred_fallthru
          _
      $region52: #{tpu_custom_call.1} parent=5 // pred_fallthru
        _
      %p864 = scmp.le.s32.totalorder 2, %s20
      // Predicated region
      $region61: #{tpu_custom_call.1} parent=5 // pred_check
        %p865 = pneg %p864
      $region62: #{tpu_custom_call.1} parent=5 // pred_check_branch
        %867 = sbr.rel (%p865) target = $region64
      $region63: #{tpu_custom_call.1} parent=5 // pred_region
        %s868 = ssub.s32 %s20, 2
        // Predicated region
        $region65: #{tpu_custom_call.1} parent=63 // pred_check
          %p869 = pneg %p227
        $region66: #{tpu_custom_call.1} parent=63 // pred_check_branch
          %871 = sbr.rel (%p869) target = $region68
        $region67: #{tpu_custom_call.1} parent=63 // pred_region
          %s872 = sand.u32 %s212, 1
          %s873 = scalar_lea.sflag [#allocation4], %s872
          %s874 = sand.u32 %s212, 1
          %s875 = smul.addr %s874, 64
          %s876 = scalar_lea.vmem [#allocation5], %s875
          %877 = dma.done %s873, 1024
        $region68: #{tpu_custom_call.1} parent=63 // pred_fallthru
          _
      $region64: #{tpu_custom_call.1} parent=5 // pred_fallthru
        _
    $region6: #{tpu_custom_call.1} parent=1 // loop_footer
      %s24 = sadd.s32 1, %s20
    $region7: #{tpu_custom_call.1} parent=1 // loop_footer_branch
      %19 = sbr.rel target = $region3
    $region8: #{tpu_custom_call.1} parent=1 // loop_exit
      _
    %878 = vsyncpa [#allocation3], 1
    %s879 = scalar_lea.sflag [#allocation3], 1
    %880 = vsyncpa %s879, 1
    %881 = vsyncpa [#allocation4], 1
    %s882 = scalar_lea.sflag [#allocation4], 1
    %883 = vsyncpa %s882, 1

</llo_original>
